<compile_context>
chip_gen: v5e
topology: v5e:2x2
jax: 0.10.0
libtpu: 0.0.40
codegen_flags: <defaults>
</compile_context>

<pallas_src>
import jax
import jax.numpy as jnp
from jax.experimental import pallas as pl
from jax.experimental.pallas import tpu as pltpu


def trend_mlp_kernel(xT_ref, w1_ref, b1_ref, w2_ref, b2_ref, w3_ref, b3_ref, o_ref):
    # xT: (10, TB); weights (out, in); biases (out, 1); output (2, TB).
    xT = xT_ref[...]

    # fc1 + ReLU  -> (64, TB)
    h1 = jnp.dot(w1_ref[...], xT, preferred_element_type=jnp.float32) + b1_ref[...]
    h1 = jnp.maximum(h1, 0.0)

    # fc2 + ReLU  -> (64, TB)
    h2 = jnp.dot(w2_ref[...], h1, preferred_element_type=jnp.float32) + b2_ref[...]
    h2 = jnp.maximum(h2, 0.0)

    # fc3         -> (2, TB)
    logits = jnp.dot(w3_ref[...], h2, preferred_element_type=jnp.float32) + b3_ref[...]

    # log_softmax over the 2-class (sublane) axis, closed form:
    #   out_0 = -softplus(l1 - l0),  out_1 = -softplus(l0 - l1)
    # stable softplus(z) = max(z, 0) + log1p(exp(-|z|))  (exp/log1p hit the EUP slot)
    d = logits[1:2, :] - logits[0:1, :]           # (1, TB)
    sp = lambda z: jnp.maximum(z, 0.0) + jnp.log1p(jnp.exp(-jnp.abs(z)))
    o_ref[...] = jnp.concatenate([-sp(d), -sp(-d)], axis=0)


def trend_model_forward(x, params, *, tb=2048):
    """x: (B, 10) float32 -> (B, 2) float32 log-probabilities.

    params are in the PyTorch-like (in, out) / (1, out) layout; they are
    transposed once here to the feature-major layout the kernel uses.
    """
    w1, b1, w2, b2, w3, b3 = params
    B = x.shape[0]

    # Tile size: lane-dense (multiple of 128), capped so two x/out buffers plus
    # weights comfortably fit the smallest scoped-VMEM budget (v5e 16 MiB,
    # v7x 64 MiB physical).  Shrink for tiny batches so we don't over-pad.
    tb = min(tb, max(128, ((B + 127) // 128) * 128))
    b_pad = pl.cdiv(B, tb) * tb

    # Transposed, zero-padded input (padded columns produce garbage rows that
    # are sliced away below — no NaN risk since pads are zeros).
    xT = jnp.zeros((10, b_pad), jnp.float32).at[:, :B].set(x.T)

    # Weights -> (out, in); biases -> (out, 1) so they broadcast along lanes.
    w1T, w2T, w3T = w1.T, w2.T, w3.T
    b1c, b2c, b3c = b1.reshape(-1, 1), b2.reshape(-1, 1), b3.reshape(-1, 1)

    resident = lambda a: pl.BlockSpec(a.shape, lambda i: (0, 0))

    outT = pl.pallas_call(
        trend_mlp_kernel,
        out_shape=jax.ShapeDtypeStruct((2, b_pad), jnp.float32),
        grid=(b_pad // tb,),
        in_specs=[
            pl.BlockSpec((10, tb), lambda i: (0, i)),   # x tile moves with grid
            resident(w1T), resident(b1c),               # weights/biases stay put
            resident(w2T), resident(b2c),
            resident(w3T), resident(b3c),
        ],
        out_specs=pl.BlockSpec((2, tb), lambda i: (0, i)),
        compiler_params=pltpu.CompilerParams(
            dimension_semantics=("parallel",),          # v7x: shard batch over 2 TCs
        ),
    )(xT, w1T, b1c, w2T, b2c, w3T, b3c)

    return outT[:, :B].T


def init_params(key):
    """Deterministic parameter init mimicking PyTorch Linear default
    (uniform in +/- 1/sqrt(fan_in)). Weights stored as (in, out)."""
    dims = [(10, 64), (64, 64), (64, 2)]
    params = []
    for (fan_in, fan_out) in dims:
        key, kw, kb = jax.random.split(key, 3)
        bound = 1.0 / jnp.sqrt(fan_in)
        w = jax.random.uniform(kw, (fan_in, fan_out), jnp.float32, -bound, bound)
        b = jax.random.uniform(kb, (1, fan_out), jnp.float32, -bound, bound)
        params += [w, b]
    return tuple(params)


def reference_forward(x, params):
    w1, b1, w2, b2, w3, b3 = params
    h = jnp.maximum(x @ w1 + b1, 0.0)
    h = jnp.maximum(h @ w2 + b2, 0.0)
    logits = h @ w3 + b3
    return jax.nn.log_softmax(logits, axis=1)


if __name__ == "__main__":
    key = jax.random.PRNGKey(0)
    key, kx = jax.random.split(key)

    B = 8
    x = jax.random.normal(kx, (B, 10), jnp.float32)
    params = init_params(key)

    out = trend_model_forward(x, params)
    out = jax.block_until_ready(out)

    ref = reference_forward(x, params)
    assert out.shape == (B, 2)
    assert jnp.allclose(out, ref, atol=1e-5, rtol=1e-5)

    print("KERNEL_OK")
</pallas_src>

<mosaic_0001>
module attributes {stable_mosaic.version = 11 : i64} {
  func.func @trend_mlp_kernel(%arg0: i32, %arg1: memref<10x128xf32, #tpu.memory_space<vmem>>, %arg2: memref<64x10xf32, #tpu.memory_space<vmem>>, %arg3: memref<64x1xf32, #tpu.memory_space<vmem>>, %arg4: memref<64x64xf32, #tpu.memory_space<vmem>>, %arg5: memref<64x1xf32, #tpu.memory_space<vmem>>, %arg6: memref<2x64xf32, #tpu.memory_space<vmem>>, %arg7: memref<2x1xf32, #tpu.memory_space<vmem>>, %arg8: memref<2x128xf32, #tpu.memory_space<vmem>>) attributes {dimension_semantics = [#tpu.dimension_semantics<parallel>], iteration_bounds = array<i64: 1>, scalar_prefetch = 0 : i64, scratch_operands = 0 : i64, tpu.core_type = #tpu.core_type<tc>, window_params = [{transform_indices = @transform_0, window_bounds = array<i64: 10, 128>}, {pipeline_mode = #tpu.pipeline_mode<synchronous>, transform_indices = @transform_1, window_bounds = array<i64: 64, 10>}, {pipeline_mode = #tpu.pipeline_mode<synchronous>, transform_indices = @transform_2, window_bounds = array<i64: 64, 1>}, {pipeline_mode = #tpu.pipeline_mode<synchronous>, transform_indices = @transform_3, window_bounds = array<i64: 64, 64>}, {pipeline_mode = #tpu.pipeline_mode<synchronous>, transform_indices = @transform_4, window_bounds = array<i64: 64, 1>}, {pipeline_mode = #tpu.pipeline_mode<synchronous>, transform_indices = @transform_5, window_bounds = array<i64: 2, 64>}, {pipeline_mode = #tpu.pipeline_mode<synchronous>, transform_indices = @transform_6, window_bounds = array<i64: 2, 1>}, {transform_indices = @transform_7, window_bounds = array<i64: 2, 128>}]} {
    %c0 = arith.constant 0 : index
    %c0_0 = arith.constant 0 : index
    %0 = vector.load %arg1[%c0, %c0_0] : memref<10x128xf32, #tpu.memory_space<vmem>>, vector<10x128xf32>
    %c0_1 = arith.constant 0 : index
    %c0_2 = arith.constant 0 : index
    %1 = vector.load %arg2[%c0_1, %c0_2] : memref<64x10xf32, #tpu.memory_space<vmem>>, vector<64x10xf32>
    %cst = arith.constant dense<0.000000e+00> : vector<64x128xf32>
    %2 = tpu.matmul %1, %0, %cst {dimension_numbers = #tpu.dot_dimension_numbers<[1], [0], [0], [1], [0, 0, 1, 1], [], []>} : vector<64x10xf32>, vector<10x128xf32>, vector<64x128xf32> -> vector<64x128xf32>
    %c0_3 = arith.constant 0 : index
    %c0_4 = arith.constant 0 : index
    %3 = vector.load %arg3[%c0_3, %c0_4] : memref<64x1xf32, #tpu.memory_space<vmem>>, vector<64x1xf32>
    %4 = vector.broadcast %3 : vector<64x1xf32> to vector<64x128xf32>
    %5 = arith.addf %2, %4 : vector<64x128xf32>
    %cst_5 = arith.constant 0.000000e+00 : f32
    %6 = vector.broadcast %cst_5 : f32 to vector<64x128xf32>
    %7 = arith.maximumf %5, %6 : vector<64x128xf32>
    %c0_6 = arith.constant 0 : index
    %c0_7 = arith.constant 0 : index
    %8 = vector.load %arg4[%c0_6, %c0_7] : memref<64x64xf32, #tpu.memory_space<vmem>>, vector<64x64xf32>
    %cst_8 = arith.constant dense<0.000000e+00> : vector<64x128xf32>
    %9 = tpu.matmul %8, %7, %cst_8 {dimension_numbers = #tpu.dot_dimension_numbers<[1], [0], [0], [1], [0, 0, 1, 1], [], []>} : vector<64x64xf32>, vector<64x128xf32>, vector<64x128xf32> -> vector<64x128xf32>
    %c0_9 = arith.constant 0 : index
    %c0_10 = arith.constant 0 : index
    %10 = vector.load %arg5[%c0_9, %c0_10] : memref<64x1xf32, #tpu.memory_space<vmem>>, vector<64x1xf32>
    %11 = vector.broadcast %10 : vector<64x1xf32> to vector<64x128xf32>
    %12 = arith.addf %9, %11 : vector<64x128xf32>
    %cst_11 = arith.constant 0.000000e+00 : f32
    %13 = vector.broadcast %cst_11 : f32 to vector<64x128xf32>
    %14 = arith.maximumf %12, %13 : vector<64x128xf32>
    %c0_12 = arith.constant 0 : index
    %c0_13 = arith.constant 0 : index
    %15 = vector.load %arg6[%c0_12, %c0_13] : memref<2x64xf32, #tpu.memory_space<vmem>>, vector<2x64xf32>
    %cst_14 = arith.constant dense<0.000000e+00> : vector<2x128xf32>
    %16 = tpu.matmul %15, %14, %cst_14 {dimension_numbers = #tpu.dot_dimension_numbers<[1], [0], [0], [1], [0, 0, 1, 1], [], []>} : vector<2x64xf32>, vector<64x128xf32>, vector<2x128xf32> -> vector<2x128xf32>
    %c0_15 = arith.constant 0 : index
    %c0_16 = arith.constant 0 : index
    %17 = vector.load %arg7[%c0_15, %c0_16] : memref<2x1xf32, #tpu.memory_space<vmem>>, vector<2x1xf32>
    %18 = vector.broadcast %17 : vector<2x1xf32> to vector<2x128xf32>
    %19 = arith.addf %16, %18 : vector<2x128xf32>
    %20 = vector.extract_strided_slice %19 {offsets = [1, 0], sizes = [1, 128], strides = [1, 1]} : vector<2x128xf32> to vector<1x128xf32>
    %21 = vector.extract_strided_slice %19 {offsets = [0, 0], sizes = [1, 128], strides = [1, 1]} : vector<2x128xf32> to vector<1x128xf32>
    %22 = arith.subf %20, %21 : vector<1x128xf32>
    %cst_17 = arith.constant 0.000000e+00 : f32
    %23 = vector.broadcast %cst_17 : f32 to vector<1x128xf32>
    %24 = arith.maximumf %22, %23 : vector<1x128xf32>
    %25 = math.absf %22 : vector<1x128xf32>
    %cst_18 = arith.constant 0.000000e+00 : f32
    %26 = vector.broadcast %cst_18 : f32 to vector<1x128xf32>
    %27 = arith.subf %26, %25 : vector<1x128xf32>
    %28 = math.exp %27 : vector<1x128xf32>
    %29 = math.log1p %28 : vector<1x128xf32>
    %30 = arith.addf %24, %29 : vector<1x128xf32>
    %cst_19 = arith.constant 0.000000e+00 : f32
    %31 = vector.broadcast %cst_19 : f32 to vector<1x128xf32>
    %32 = arith.subf %31, %30 : vector<1x128xf32>
    %cst_20 = arith.constant 0.000000e+00 : f32
    %33 = vector.broadcast %cst_20 : f32 to vector<1x128xf32>
    %34 = arith.subf %33, %22 : vector<1x128xf32>
    %cst_21 = arith.constant 0.000000e+00 : f32
    %35 = vector.broadcast %cst_21 : f32 to vector<1x128xf32>
    %36 = arith.maximumf %34, %35 : vector<1x128xf32>
    %37 = math.absf %34 : vector<1x128xf32>
    %cst_22 = arith.constant 0.000000e+00 : f32
    %38 = vector.broadcast %cst_22 : f32 to vector<1x128xf32>
    %39 = arith.subf %38, %37 : vector<1x128xf32>
    %40 = math.exp %39 : vector<1x128xf32>
    %41 = math.log1p %40 : vector<1x128xf32>
    %42 = arith.addf %36, %41 : vector<1x128xf32>
    %cst_23 = arith.constant 0.000000e+00 : f32
    %43 = vector.broadcast %cst_23 : f32 to vector<1x128xf32>
    %44 = arith.subf %43, %42 : vector<1x128xf32>
    %45 = tpu.concatenate %32, %44 in 0 : vector<1x128xf32>, vector<1x128xf32> -> vector<2x128xf32>
    %c0_24 = arith.constant 0 : index
    %c0_25 = arith.constant 0 : index
    %46 = vector.load %arg8[%c0_24, %c0_25] : memref<2x128xf32, #tpu.memory_space<vmem>>, vector<2x128xf32>
    tpu.vector_store %arg8[%c0_24, %c0_25], %45 {strides = array<i32>} : memref<2x128xf32, #tpu.memory_space<vmem>>, vector<2x128xf32>,
    return
  }
  func.func @transform_0(%arg0: i32) -> (i32, i32) {
    %c0_i32 = arith.constant 0 : i32
    %c0_i32_0 = arith.constant 0 : i32
    return %c0_i32, %arg0 : i32, i32
  }
  func.func @transform_1(%arg0: i32) -> (i32, i32) {
    %c0_i32 = arith.constant 0 : i32
    %c0_i32_0 = arith.constant 0 : i32
    %c0_i32_1 = arith.constant 0 : i32
    return %c0_i32, %c0_i32_0 : i32, i32
  }
  func.func @transform_2(%arg0: i32) -> (i32, i32) {
    %c0_i32 = arith.constant 0 : i32
    %c0_i32_0 = arith.constant 0 : i32
    %c0_i32_1 = arith.constant 0 : i32
    return %c0_i32, %c0_i32_0 : i32, i32
  }
  func.func @transform_3(%arg0: i32) -> (i32, i32) {
    %c0_i32 = arith.constant 0 : i32
    %c0_i32_0 = arith.constant 0 : i32
    %c0_i32_1 = arith.constant 0 : i32
    return %c0_i32, %c0_i32_0 : i32, i32
  }
  func.func @transform_4(%arg0: i32) -> (i32, i32) {
    %c0_i32 = arith.constant 0 : i32
    %c0_i32_0 = arith.constant 0 : i32
    %c0_i32_1 = arith.constant 0 : i32
    return %c0_i32, %c0_i32_0 : i32, i32
  }
  func.func @transform_5(%arg0: i32) -> (i32, i32) {
    %c0_i32 = arith.constant 0 : i32
    %c0_i32_0 = arith.constant 0 : i32
    %c0_i32_1 = arith.constant 0 : i32
    return %c0_i32, %c0_i32_0 : i32, i32
  }
  func.func @transform_6(%arg0: i32) -> (i32, i32) {
    %c0_i32 = arith.constant 0 : i32
    %c0_i32_0 = arith.constant 0 : i32
    %c0_i32_1 = arith.constant 0 : i32
    return %c0_i32, %c0_i32_0 : i32, i32
  }
  func.func @transform_7(%arg0: i32) -> (i32, i32) {
    %c0_i32 = arith.constant 0 : i32
    %c0_i32_0 = arith.constant 0 : i32
    return %c0_i32, %arg0 : i32, i32
  }
}

</mosaic_0001>

<llo_original>
// kernel: tpu_custom_call.1
$region0: #{tpu_custom_call.1}
  #allocation0 [shape = 'u32[]', space=smem, size = 0x4, offset = 0x4, fixed_abs, tag = 'smem constant byte address 0x4 - core index']
  #allocation1 [shape = 'u32[72,128]{1,0:T(1,128)}', space=vmem, size = 0x9000, scoped, tag = 'internal scratch']
  %s0 = inlined_call_operand.vmem [shape: f32[10,128], index: 0, kind: input, shape index: {}]
  %s1 = inlined_call_operand.vmem [shape: f32[64,10], index: 1, kind: input, shape index: {}]
  %s2 = inlined_call_operand.vmem [shape: f32[64,1], index: 2, kind: input, shape index: {}]
  %s3 = inlined_call_operand.vmem [shape: f32[64,64], index: 3, kind: input, shape index: {}]
  %s4 = inlined_call_operand.vmem [shape: f32[64,1], index: 4, kind: input, shape index: {}]
  %s5 = inlined_call_operand.vmem [shape: f32[2,64], index: 5, kind: input, shape index: {}]
  %s6 = inlined_call_operand.vmem [shape: f32[2,1], index: 6, kind: input, shape index: {}]
  %s7 = inlined_call_operand.hbm [shape: f32[2,128], index: 7, kind: output, shape index: {}]
  %s8 = sld [smem:[#allocation0]]
  $region38: #{tpu_custom_call.1} parent=0
    _
  %s10 = ssub.s32 1, %s8
  %s11 = scalar_select 0, %s10, %s8
  $region1: #{tpu_custom_call.1} parent=0
    #allocation2 [shape = 'u8[1024]{0}', space=vmem, size = 0x400, scoped, tag = 'output window, operand 0, single buffered']
    #allocation3 [shape = 's32[1]{0}', space=sflag, size = 0x4, scoped, tag = 'scoped memory for tpu_custom_call.1']
    %12 = vsyncpa [#allocation3], 0
    // Predicated region
    $region2: #{tpu_custom_call.1} parent=1 // pred_check
      _
    $region3: #{tpu_custom_call.1} parent=1 // pred_check_branch
      %14 = sbr.rel (0) target = $region5
    $region4: #{tpu_custom_call.1} parent=1 // pred_region
      _
    $region5: #{tpu_custom_call.1} parent=1 // pred_fallthru
      _
    // Predicated region
    $region6: #{tpu_custom_call.1} parent=1 // pred_check
      _
    $region7: #{tpu_custom_call.1} parent=1 // pred_check_branch
      %16 = sbr.rel (0) target = $region9
    $region8: #{tpu_custom_call.1} parent=1 // pred_region
      _
    $region9: #{tpu_custom_call.1} parent=1 // pred_fallthru
      _
    // Predicated region
    $region10: #{tpu_custom_call.1} parent=1 // pred_check
      _
    $region11: #{tpu_custom_call.1} parent=1 // pred_check_branch
      %18 = sbr.rel (0) target = $region13
    $region12: #{tpu_custom_call.1} parent=1 // pred_region
      _
    $region13: #{tpu_custom_call.1} parent=1 // pred_fallthru
      _
    // Predicated region
    $region14: #{tpu_custom_call.1} parent=1 // pred_check
      _
    $region15: #{tpu_custom_call.1} parent=1 // pred_check_branch
      %20 = sbr.rel (0) target = $region17
    $region16: #{tpu_custom_call.1} parent=1 // pred_region
      _
    $region17: #{tpu_custom_call.1} parent=1 // pred_fallthru
      _
    // Predicated region
    $region18: #{tpu_custom_call.1} parent=1 // pred_check
      _
    $region19: #{tpu_custom_call.1} parent=1 // pred_check_branch
      %22 = sbr.rel (0) target = $region21
    $region20: #{tpu_custom_call.1} parent=1 // pred_region
      _
    $region21: #{tpu_custom_call.1} parent=1 // pred_fallthru
      _
    // Predicated region
    $region22: #{tpu_custom_call.1} parent=1 // pred_check
      _
    $region23: #{tpu_custom_call.1} parent=1 // pred_check_branch
      %24 = sbr.rel (0) target = $region25
    $region24: #{tpu_custom_call.1} parent=1 // pred_region
      _
    $region25: #{tpu_custom_call.1} parent=1 // pred_fallthru
      _
    // Predicated region
    $region26: #{tpu_custom_call.1} parent=1 // pred_check
      _
    $region27: #{tpu_custom_call.1} parent=1 // pred_check_branch
      %26 = sbr.rel (0) target = $region29
    $region28: #{tpu_custom_call.1} parent=1 // pred_region
      _
    $region29: #{tpu_custom_call.1} parent=1 // pred_fallthru
      _
    %v27 = vld [vmem:[%s0] sm:$0xff]
    %v28 = vld [vmem:[%s0 + $0x8] sm:$0x3]
    %v29 = vld [vmem:[%s1] sm:$0xff]
    %v30 = vld [vmem:[%s1 + $0x8] sm:$0xff]
    %v31 = vld [vmem:[%s1 + $0x10] sm:$0xff]
    %v32 = vld [vmem:[%s1 + $0x18] sm:$0xff]
    %v33 = vld [vmem:[%s1 + $0x20] sm:$0xff]
    %v34 = vld [vmem:[%s1 + $0x28] sm:$0xff]
    %v35 = vld [vmem:[%s1 + $0x30] sm:$0xff]
    %v36 = vld [vmem:[%s1 + $0x38] sm:$0xff]
    %v37 = vld [vmem:[%s2] sm:$0xff]
    %v38 = vld [vmem:[%s2 + $0x8] sm:$0xff]
    %v39 = vld [vmem:[%s2 + $0x10] sm:$0xff]
    %v40 = vld [vmem:[%s2 + $0x18] sm:$0xff]
    %v41 = vld [vmem:[%s2 + $0x20] sm:$0xff]
    %v42 = vld [vmem:[%s2 + $0x28] sm:$0xff]
    %v43 = vld [vmem:[%s2 + $0x30] sm:$0xff]
    %v44 = vld [vmem:[%s2 + $0x38] sm:$0xff]
    %46 = vset.pattern.permute.xlu0 0
    %47 = vperm.xlu0 %46, %v37
    %v48 = vpop.permute.xlu0 %47
    %51 = vset.pattern.permute.xlu0 0
    %52 = vperm.xlu0 %51, %v38
    %v53 = vpop.permute.xlu0 %52
    %56 = vset.pattern.permute.xlu0 0
    %57 = vperm.xlu0 %56, %v39
    %v58 = vpop.permute.xlu0 %57
    %61 = vset.pattern.permute.xlu0 0
    %62 = vperm.xlu0 %61, %v40
    %v63 = vpop.permute.xlu0 %62
    %66 = vset.pattern.permute.xlu0 0
    %67 = vperm.xlu0 %66, %v41
    %v68 = vpop.permute.xlu0 %67
    %71 = vset.pattern.permute.xlu0 0
    %72 = vperm.xlu0 %71, %v42
    %v73 = vpop.permute.xlu0 %72
    %76 = vset.pattern.permute.xlu0 0
    %77 = vperm.xlu0 %76, %v43
    %v78 = vpop.permute.xlu0 %77
    %81 = vset.pattern.permute.xlu0 0
    %82 = vperm.xlu0 %81, %v44
    %v83 = vpop.permute.xlu0 %82
    %vm85 = vcmask 80896
    %v87 = vsel %vm85, %v29, 0
    %v90 = vsel %vm85, %v30, 0
    %v93 = vsel %vm85, %v31, 0
    %v96 = vsel %vm85, %v32, 0
    %v99 = vsel %vm85, %v33, 0
    %v102 = vsel %vm85, %v34, 0
    %v105 = vsel %vm85, %v35, 0
    %v108 = vsel %vm85, %v36, 0
    %vm110 = vcmask 1041408
    %v112 = vsel %vm110, %v28, 0
    %114 = vmatpush.msra.mxu0 0.0
    %115 = vmatpush.msra.mxu0 0.0
    %116 = vmatpush.msra.mxu0 0.0
    %117 = vmatpush.msra.mxu0 0.0
    %118 = vmatpush.msra.mxu0 0.0
    %119 = vmatpush.msra.mxu0 0.0
    %120 = vmatpush.msra.mxu0 0.0
    %121 = vmatpush.msra.mxu0 0.0
    %122 = vmatpush.msra.mxu0 0.0
    %123 = vmatpush.msra.mxu0 0.0
    %124 = vmatpush.msra.mxu0 0.0
    %125 = vmatpush.msra.mxu0 0.0
    %126 = vmatpush.msra.mxu0 0.0
    %127 = vmatpush.msra.mxu0 0.0
    %128 = vmatpush.msra.mxu0 %v112
    %129 = vmatpush.msra.mxu0 %v27
    %130 = vmatmul.f32.gmra.mxu0 %v87
    %v131 = vpop.f32.mrf.mxu0
    %v132 = vadd.f32 %v48, %v131
    %133 = vmatmul.f32.gmra.mxu0 %v90
    %v134 = vpop.f32.mrf.mxu0
    %v135 = vadd.f32 %v53, %v134
    %136 = vmatmul.f32.gmra.mxu0 %v93
    %v137 = vpop.f32.mrf.mxu0
    %v138 = vadd.f32 %v58, %v137
    %139 = vmatmul.f32.gmra.mxu0 %v96
    %v140 = vpop.f32.mrf.mxu0
    %v141 = vadd.f32 %v63, %v140
    %142 = vmatmul.f32.gmra.mxu0 %v99
    %v143 = vpop.f32.mrf.mxu0
    %v144 = vadd.f32 %v68, %v143
    %145 = vmatmul.f32.gmra.mxu0 %v102
    %v146 = vpop.f32.mrf.mxu0
    %v147 = vadd.f32 %v73, %v146
    %148 = vmatmul.f32.gmra.mxu0 %v105
    %v149 = vpop.f32.mrf.mxu0
    %v150 = vadd.f32 %v78, %v149
    %151 = vmatmul.f32.gmra.mxu0 %v108
    %v152 = vpop.f32.mrf.mxu0
    %v153 = vadd.f32 %v83, %v152
    %154 = vdwg.mxu0
    %v155 = vmax.f32 %v132, 0.0
    %v156 = vmax.f32 %v135, 0.0
    %v157 = vmax.f32 %v138, 0.0
    %v158 = vmax.f32 %v141, 0.0
    %v159 = vmax.f32 %v144, 0.0
    %v160 = vmax.f32 %v147, 0.0
    %v161 = vmax.f32 %v150, 0.0
    %v162 = vmax.f32 %v153, 0.0
    %v163 = vld [vmem:[%s3] sm:$0xff]
    %v164 = vld [vmem:[%s3 + $0x8] sm:$0xff]
    %v165 = vld [vmem:[%s3 + $0x10] sm:$0xff]
    %v166 = vld [vmem:[%s3 + $0x18] sm:$0xff]
    %v167 = vld [vmem:[%s3 + $0x20] sm:$0xff]
    %v168 = vld [vmem:[%s3 + $0x28] sm:$0xff]
    %v169 = vld [vmem:[%s3 + $0x30] sm:$0xff]
    %v170 = vld [vmem:[%s3 + $0x38] sm:$0xff]
    %v171 = vld [vmem:[%s4] sm:$0xff]
    %v172 = vld [vmem:[%s4 + $0x8] sm:$0xff]
    %v173 = vld [vmem:[%s4 + $0x10] sm:$0xff]
    %v174 = vld [vmem:[%s4 + $0x18] sm:$0xff]
    %v175 = vld [vmem:[%s4 + $0x20] sm:$0xff]
    %v176 = vld [vmem:[%s4 + $0x28] sm:$0xff]
    %v177 = vld [vmem:[%s4 + $0x30] sm:$0xff]
    %v178 = vld [vmem:[%s4 + $0x38] sm:$0xff]
    %180 = vset.pattern.permute.xlu0 0
    %181 = vperm.xlu0 %180, %v171
    %v182 = vpop.permute.xlu0 %181
    %185 = vset.pattern.permute.xlu0 0
    %186 = vperm.xlu0 %185, %v172
    %v187 = vpop.permute.xlu0 %186
    %190 = vset.pattern.permute.xlu0 0
    %191 = vperm.xlu0 %190, %v173
    %v192 = vpop.permute.xlu0 %191
    %195 = vset.pattern.permute.xlu0 0
    %196 = vperm.xlu0 %195, %v174
    %v197 = vpop.permute.xlu0 %196
    %200 = vset.pattern.permute.xlu0 0
    %201 = vperm.xlu0 %200, %v175
    %v202 = vpop.permute.xlu0 %201
    %205 = vset.pattern.permute.xlu0 0
    %206 = vperm.xlu0 %205, %v176
    %v207 = vpop.permute.xlu0 %206
    %210 = vset.pattern.permute.xlu0 0
    %211 = vperm.xlu0 %210, %v177
    %v212 = vpop.permute.xlu0 %211
    %215 = vset.pattern.permute.xlu0 0
    %216 = vperm.xlu0 %215, %v178
    %v217 = vpop.permute.xlu0 %216
    %vm219 = vcmask 523264
    %v221 = vsel %vm219, %v163, 0
    %v224 = vsel %vm219, %v164, 0
    %v227 = vsel %vm219, %v165, 0
    %v230 = vsel %vm219, %v166, 0
    %v233 = vsel %vm219, %v167, 0
    %v236 = vsel %vm219, %v168, 0
    %v239 = vsel %vm219, %v169, 0
    %v242 = vsel %vm219, %v170, 0
    %244 = vmatpush.msra.mxu0 0.0
    %245 = vmatpush.msra.mxu0 0.0
    %246 = vmatpush.msra.mxu0 0.0
    %247 = vmatpush.msra.mxu0 0.0
    %248 = vmatpush.msra.mxu0 0.0
    %249 = vmatpush.msra.mxu0 0.0
    %250 = vmatpush.msra.mxu0 0.0
    %251 = vmatpush.msra.mxu0 0.0
    %252 = vmatpush.msra.mxu0 %v162
    %253 = vmatpush.msra.mxu0 %v161
    %254 = vmatpush.msra.mxu0 %v160
    %255 = vmatpush.msra.mxu0 %v159
    %256 = vmatpush.msra.mxu0 %v158
    %257 = vmatpush.msra.mxu0 %v157
    %258 = vmatpush.msra.mxu0 %v156
    %259 = vmatpush.msra.mxu0 %v155
    %260 = vmatmul.f32.gmra.mxu0 %v221
    %v261 = vpop.f32.mrf.mxu0
    %v262 = vadd.f32 %v182, %v261
    %263 = vmatmul.f32.gmra.mxu0 %v224
    %v264 = vpop.f32.mrf.mxu0
    %v265 = vadd.f32 %v187, %v264
    %266 = vmatmul.f32.gmra.mxu0 %v227
    %v267 = vpop.f32.mrf.mxu0
    %v268 = vadd.f32 %v192, %v267
    %269 = vmatmul.f32.gmra.mxu0 %v230
    %v270 = vpop.f32.mrf.mxu0
    %v271 = vadd.f32 %v197, %v270
    %272 = vmatmul.f32.gmra.mxu0 %v233
    %v273 = vpop.f32.mrf.mxu0
    %v274 = vadd.f32 %v202, %v273
    %275 = vmatmul.f32.gmra.mxu0 %v236
    %v276 = vpop.f32.mrf.mxu0
    %v277 = vadd.f32 %v207, %v276
    %278 = vmatmul.f32.gmra.mxu0 %v239
    %v279 = vpop.f32.mrf.mxu0
    %v280 = vadd.f32 %v212, %v279
    %281 = vmatmul.f32.gmra.mxu0 %v242
    %v282 = vpop.f32.mrf.mxu0
    %v283 = vadd.f32 %v217, %v282
    %284 = vdwg.mxu0
    %v285 = vmax.f32 %v262, 0.0
    %v286 = vmax.f32 %v265, 0.0
    %v287 = vmax.f32 %v268, 0.0
    %v288 = vmax.f32 %v271, 0.0
    %v289 = vmax.f32 %v274, 0.0
    %v290 = vmax.f32 %v277, 0.0
    %v291 = vmax.f32 %v280, 0.0
    %v292 = vmax.f32 %v283, 0.0
    %v293 = vld [vmem:[%s5] sm:$0x3]
    %v294 = vld [vmem:[%s6] sm:$0x3]
    %296 = vset.pattern.permute.xlu0 0
    %297 = vperm.xlu0 %296, %v294
    %v298 = vpop.permute.xlu0 %297
    %v301 = vsel %vm219, %v293, 0
    %303 = vmatpush.msra.mxu0 0.0
    %304 = vmatpush.msra.mxu0 0.0
    %305 = vmatpush.msra.mxu0 0.0
    %306 = vmatpush.msra.mxu0 0.0
    %307 = vmatpush.msra.mxu0 0.0
    %308 = vmatpush.msra.mxu0 0.0
    %309 = vmatpush.msra.mxu0 0.0
    %310 = vmatpush.msra.mxu0 0.0
    %311 = vmatpush.msra.mxu0 %v292
    %312 = vmatpush.msra.mxu0 %v291
    %313 = vmatpush.msra.mxu0 %v290
    %314 = vmatpush.msra.mxu0 %v289
    %315 = vmatpush.msra.mxu0 %v288
    %316 = vmatpush.msra.mxu0 %v287
    %317 = vmatpush.msra.mxu0 %v286
    %318 = vmatpush.msra.mxu0 %v285
    %319 = vmatmul.f32.gmra.mxu0 %v301
    %v320 = vpop.f32.mrf.mxu0
    %v321 = vadd.f32 %v298, %v320
    %322 = vdwg.mxu0
    %v324 = vrot.slane %v321, 7
    %v326 = vsub.f32 %v321, %v324
    %v327 = vmax.f32 %v326, 0.0
    %v328 = vand.u32 2147483647, %v326
    %v329 = vsub.f32 0.0, %v328
    %v330 = vmul.f32 %v329, 1.442695
    %v331 = vpow.pop %v330
    %v332 = vadd.f32 %v331, 1.0
    %v333 = vlog2.pop %v332
    %v334 = vmul.f32 %v333, 0.6931472
    %v335 = vmul.f32 -0.5, %v331
    %v336 = vadd.f32 %v335, 1.0
    %v337 = vmul.f32 %v336, %v331
    %v338 = vand.u32 2147483647, %v331
    %vm339 = vcmp.lt.f32.partialorder %v338, 0.0004427343
    %v340 = vsel %vm339, %v337, %v334
    %v341 = vadd.f32 %v327, %v340
    %v342 = vsub.f32 0.0, %v341
    %v343 = vsub.f32 0.0, %v326
    %v344 = vmax.f32 %v343, 0.0
    %v345 = vand.u32 2147483647, %v343
    %v346 = vsub.f32 0.0, %v345
    %v347 = vmul.f32 %v346, 1.442695
    %v348 = vpow.pop %v347
    %v349 = vadd.f32 %v348, 1.0
    %v350 = vlog2.pop %v349
    %v351 = vmul.f32 %v350, 0.6931472
    %v352 = vmul.f32 -0.5, %v348
    %v353 = vadd.f32 %v352, 1.0
    %v354 = vmul.f32 %v353, %v348
    %v355 = vand.u32 2147483647, %v348
    %vm356 = vcmp.lt.f32.partialorder %v355, 0.0004427343
    %v357 = vsel %vm356, %v354, %v351
    %v358 = vadd.f32 %v344, %v357
    %v359 = vsub.f32 0.0, %v358
    %v361 = vrot.slane %v342, 1
    %vm363 = vcmask 1040384
    %v364 = vsel %vm363, %v361, %v359
    %365 = vst [vmem:[#allocation2] sm:$0x3] %v364
    // Predicated region
    $region30: #{tpu_custom_call.1} parent=1 // pred_check
      _
    $region31: #{tpu_custom_call.1} parent=1 // pred_check_branch
      %367 = sbr.rel (0) target = $region33
    $region32: #{tpu_custom_call.1} parent=1 // pred_region
      %369 = vsyncadd [#allocation3], 0
      %s371 = sshll.u32 [#allocation2], 4
      %s372 = int_to_ptr.vmem [resolvable:$true] %s371
      %s373 = sshll.u32 %s7, 4
      %s374 = int_to_ptr.hbm [resolvable:$true] %s373
      %376 = dma.vmem_to_hbm [thread:$0]  %s372, 32, %s374, [#allocation3]
    $region33: #{tpu_custom_call.1} parent=1 // pred_fallthru
      _
    // Predicated region
    $region34: #{tpu_custom_call.1} parent=1 // pred_check
      _
    $region35: #{tpu_custom_call.1} parent=1 // pred_check_branch
      %378 = sbr.rel (0) target = $region37
    $region36: #{tpu_custom_call.1} parent=1 // pred_region
      %380 = dma.done [#allocation3], 32
    $region37: #{tpu_custom_call.1} parent=1 // pred_fallthru
      _
    %381 = vsyncpa [#allocation3], 1

</llo_original>
